<compile_context>
chip_gen: v7x
topology: tpu7x:2x2x1
jax: 0.10.0
libtpu: 0.0.40
codegen_flags: <defaults>
</compile_context>

<pallas_src>
import functools
import numpy as np

import jax
import jax.numpy as jnp
from jax.experimental import pallas as pl
from jax.experimental.pallas import tpu as pltpu


_EPS = 1e-5
_VMEM = pl.BlockSpec(memory_space=pltpu.MemorySpace.VMEM)


def _round_up(x, m):
    return ((x + m - 1) // m) * m


# ---------------------------------------------------------------------------
# In-kernel helpers (traced inside the fused kernel)
# ---------------------------------------------------------------------------
def _log_softmax(z):
    m = jnp.max(z, axis=-1, keepdims=True)
    zc = z - m
    lse = jnp.log(jnp.sum(jnp.exp(zc), axis=-1, keepdims=True))
    return zc - lse


def _batchnorm_train(x, gamma, beta):
    # Single pass: reuse the centered values; fold gamma into the rsqrt scale so
    # normalize + affine is one FMA per element.
    mean = jnp.mean(x, axis=0, keepdims=True)
    c = x - mean
    var = jnp.mean(c * c, axis=0, keepdims=True)
    scale = gamma * jax.lax.rsqrt(var + _EPS)
    return c * scale + beta


# ---------------------------------------------------------------------------
# Static layout of the packed parameter slab (params + Hadamard matrix)
# ---------------------------------------------------------------------------
def _param_layout(dims, n_hidden, n_bits):
    """dims: tuple of (key, d_in) in canonical order.
    Returns (width, rows, per-key row offsets, hadamard row offset)."""
    L = 1 << n_bits
    W = _round_up(max(max(d for _, d in dims), n_hidden, L), 128)
    offsets = []
    r = 0
    for _, d in dims:
        o = {}
        o["g0"] = r;     r += 1
        o["b0"] = r;     r += 1
        o["w1"] = r;     r += d
        o["bias1"] = r;  r += 1
        o["g1"] = r;     r += 1
        o["b1aff"] = r;  r += 1
        o["w2"] = r;     r += n_hidden
        o["bias2"] = r;  r += 1
        offsets.append(o)
    h_off = r
    r += L
    R = _round_up(r, 8)
    return W, R, tuple(offsets), h_off


# ---------------------------------------------------------------------------
# Fused kernel: all branches + per-key log_softmax + WHT recombination
# ---------------------------------------------------------------------------
def _fused_groupnet_kernel(*refs, dims, offsets, h_off, n_hidden, n_bits,
                           beta_idx, masked_idx, out_width):
    """refs layout (all VMEM):
         [x_0 .. x_{n_keys-1}]  leakage inputs, (B, d_k)
         [p_ref]                packed parameter slab (rows, W), W multiple of 128
         [o_ref]                lane-dense output slab (B, out_width)
    """
    n_keys = len(dims)
    L = 1 << n_bits
    x_refs = refs[:n_keys]
    p_ref = refs[n_keys]
    o_ref = refs[n_keys + 1]
    B = x_refs[0].shape[0]

    # Hadamard matrix lives in the parameter slab (one operand instead of two).
    H = p_ref[h_off:h_off + L, 0:L]                              # (L, L)

    # --- per-leakage branches: BN -> FC -> ReLU -> BN -> FC (statically unrolled);
    #     every parameter is read via static row/lane slices of the slab.
    logits = []
    for i, (_, d) in enumerate(dims):
        o = offsets[i]
        g0    = p_ref[o["g0"]:o["g0"] + 1, 0:d]
        b0    = p_ref[o["b0"]:o["b0"] + 1, 0:d]
        w1    = p_ref[o["w1"]:o["w1"] + d, 0:n_hidden]
        bias1 = p_ref[o["bias1"]:o["bias1"] + 1, 0:n_hidden]
        g1    = p_ref[o["g1"]:o["g1"] + 1, 0:n_hidden]
        b1a   = p_ref[o["b1aff"]:o["b1aff"] + 1, 0:n_hidden]
        w2    = p_ref[o["w2"]:o["w2"] + n_hidden, 0:L]
        bias2 = p_ref[o["bias2"]:o["bias2"] + 1, 0:L]

        x = x_refs[i][...].astype(jnp.float32)                   # (B, d)
        xn = _batchnorm_train(x, g0, b0)
        h = jnp.dot(xn, w1, preferred_element_type=jnp.float32) + bias1
        h = jnp.maximum(h, 0.0)
        hn = _batchnorm_train(h, g1, b1a)
        logits.append(jnp.dot(hn, w2, preferred_element_type=jnp.float32) + bias2)

    # Stack all branch logits along the sublane axis -> one batched log_softmax
    # and one taller WHT matmul instead of n_keys tiny ones.
    all_logits = jnp.concatenate(logits, axis=0) if n_keys > 1 else logits[0]
    log_probs = _log_softmax(all_logits)                         # (n_keys*B, L)

    out_pieces = [log_probs[i * B:(i + 1) * B] for i in range(n_keys)]

    # --- GroupRecombine 'boolean': convolve_WH over (betas..., masked) RAW logits.
    if masked_idx:
        S = len(beta_idx) + 1
        inv1 = float(2.0 ** (-n_bits / S / 2.0))                 # FFWHT norm, S shares
        inv2 = float(2.0 ** (-n_bits / 2.0))                     # FFWHT norm, 1 share

        # One WHT for ALL shares (hoisted out of the masked-key loop & batched).
        wh_all = jnp.dot(all_logits, H, preferred_element_type=jnp.float32) * inv1

        beta_prod = None
        for bi in beta_idx:
            w = wh_all[bi * B:(bi + 1) * B]
            beta_prod = w if beta_prod is None else beta_prod * w

        prods = []
        for mi in masked_idx:
            wm = wh_all[mi * B:(mi + 1) * B]
            prods.append(wm if beta_prod is None else beta_prod * wm)
        prods_all = jnp.concatenate(prods, axis=0) if len(prods) > 1 else prods[0]

        # One final WHT for all masked keys.
        res = jnp.dot(prods_all, H, preferred_element_type=jnp.float32) * inv2
        tgt_log = _log_softmax(res)                              # (n_masked*B, L)
        out_pieces += [tgt_log[j * B:(j + 1) * B] for j in range(len(masked_idx))]

    # Lane-dense store: pad the packed slab up to a multiple of 128 lanes and
    # write it with a single full-ref (unmasked) store.
    used = len(out_pieces) * L
    if out_width > used:
        out_pieces.append(jnp.zeros((B, out_width - used), jnp.float32))
    o_ref[...] = jnp.concatenate(out_pieces, axis=-1)


# ---------------------------------------------------------------------------
# Host-side glue: Hadamard constant, parameters, packing, forward wrapper
# ---------------------------------------------------------------------------
@functools.lru_cache(maxsize=None)
def make_hadamard(n_bits):
    H = np.array([[1.0]], dtype=np.float32)
    for _ in range(n_bits):
        H = np.block([[H, H], [H, -H]])
    return H


def init_branch_params(key, d_in, n_hidden, n_out):
    k1, k2, k3, k4 = jax.random.split(key, 4)
    lim1 = 1.0 / np.sqrt(d_in)
    lim2 = 1.0 / np.sqrt(n_hidden)
    return {
        "g0": jnp.ones((1, d_in), jnp.float32),
        "b0": jnp.zeros((1, d_in), jnp.float32),
        "w1": jax.random.uniform(k1, (d_in, n_hidden), jnp.float32, -lim1, lim1),
        "bias1": jax.random.uniform(k2, (1, n_hidden), jnp.float32, -lim1, lim1),
        "g1": jnp.ones((1, n_hidden), jnp.float32),
        "b1aff": jnp.zeros((1, n_hidden), jnp.float32),
        "w2": jax.random.uniform(k3, (n_hidden, n_out), jnp.float32, -lim2, lim2),
        "bias2": jax.random.uniform(k4, (1, n_out), jnp.float32, -lim2, lim2),
    }


def pack_params(params, dims, n_hidden, n_bits):
    """Built ONCE at init time: a single lane-padded f32 slab holding every
    branch parameter plus the Sylvester-Hadamard matrix.  Replaces 8*n_keys + 1
    separate kernel operands with one VMEM ref."""
    L = 1 << n_bits
    W, R, offsets, h_off = _param_layout(dims, n_hidden, n_bits)
    slab = np.zeros((R, W), np.float32)
    for i, (k, d) in enumerate(dims):
        p, o = params[k], offsets[i]
        slab[o["g0"], :d] = np.asarray(p["g0"]).reshape(-1)
        slab[o["b0"], :d] = np.asarray(p["b0"]).reshape(-1)
        slab[o["w1"]:o["w1"] + d, :n_hidden] = np.asarray(p["w1"])
        slab[o["bias1"], :n_hidden] = np.asarray(p["bias1"]).reshape(-1)
        slab[o["g1"], :n_hidden] = np.asarray(p["g1"]).reshape(-1)
        slab[o["b1aff"], :n_hidden] = np.asarray(p["b1aff"]).reshape(-1)
        slab[o["w2"]:o["w2"] + n_hidden, :L] = np.asarray(p["w2"])
        slab[o["bias2"], :L] = np.asarray(p["bias2"]).reshape(-1)
    slab[h_off:h_off + L, :L] = make_hadamard(n_bits)
    return jnp.asarray(slab)


@functools.partial(jax.jit, static_argnames=("dims", "n_hidden", "n_bits"))
def groupnet_forward(leak_dict, param_slab, dims, n_hidden, n_bits):
    """GroupNet.forward with scheme='boolean', known_PoIs=True,
    normalize_probs=False, share_weights=False.  One fused pallas_call."""
    keys = tuple(k for k, _ in dims)
    beta_idx = tuple(i for i, k in enumerate(keys) if "beta" in k)
    masked_idx = tuple(i for i, k in enumerate(keys) if "masked" in k)
    L = 1 << n_bits
    B = leak_dict[keys[0]].shape[0]
    n_out = len(keys) + len(masked_idx)
    out_width = _round_up(n_out * L, 128)            # lane-dense output slab

    _, _, offsets, h_off = _param_layout(dims, n_hidden, n_bits)

    inputs = [leak_dict[k] for k in keys] + [param_slab]

    kernel = functools.partial(
        _fused_groupnet_kernel, dims=dims, offsets=offsets, h_off=h_off,
        n_hidden=n_hidden, n_bits=n_bits,
        beta_idx=beta_idx, masked_idx=masked_idx, out_width=out_width)

    slab = pl.pallas_call(
        kernel,
        out_shape=jax.ShapeDtypeStruct((B, out_width), jnp.float32),
        in_specs=[_VMEM] * len(inputs),
        out_specs=_VMEM,
        compiler_params=pltpu.CompilerParams(vmem_limit_bytes=32 * 1024 * 1024),
    )(*inputs)

    # Split the lane-dense slab back into per-key outputs (cheap wrapper slices).
    out = {}
    slot = 0
    for k in keys:
        out[k] = slab[:, slot * L:(slot + 1) * L]
        slot += 1
    for mi in masked_idx:
        out["target_" + keys[mi].split("_")[1]] = slab[:, slot * L:(slot + 1) * L]
        slot += 1
    return out


if __name__ == "__main__":
    key = jax.random.PRNGKey(0)

    # Small, forward-consistent shapes.
    batch = 8
    n_hidden = 32
    n_bits = 4                      # 2^n_bits = 16 classes
    L = 1 << n_bits
    leakage_dims = {"beta_0": 12, "beta_1": 10, "masked_0": 14}
    dims = tuple(leakage_dims.items())

    # Deterministic parameters and inputs.
    pkeys = jax.random.split(key, 2 * len(dims))
    params = {}
    leak_dict = {}
    for i, (k, d) in enumerate(dims):
        params[k] = init_branch_params(pkeys[2 * i], d, n_hidden, L)
        leak_dict[k] = jax.random.normal(pkeys[2 * i + 1], (batch, d), jnp.float32)

    param_slab = pack_params(params, dims, n_hidden, n_bits)

    out = groupnet_forward(leak_dict, param_slab, dims, n_hidden, n_bits)
    out = jax.block_until_ready(out)

    # Sanity: expected keys and shapes, finite values.
    assert set(out.keys()) == {"beta_0", "beta_1", "masked_0", "target_0"}
    for k, v in out.items():
        assert v.shape == (batch, L), (k, v.shape)
        assert bool(jnp.all(jnp.isfinite(v))), k

    print("KERNEL_OK")
</pallas_src>

<mosaic_0001>
module attributes {stable_mosaic.version = 11 : i64} {
  func.func @_fused_groupnet_kernel(%arg0: memref<8x12xf32, #tpu.memory_space<vmem>>, %arg1: memref<8x10xf32, #tpu.memory_space<vmem>>, %arg2: memref<8x14xf32, #tpu.memory_space<vmem>>, %arg3: memref<168x128xf32, #tpu.memory_space<vmem>>, %arg4: memref<8x128xf32, #tpu.memory_space<vmem>>) attributes {dimension_semantics = [], scalar_prefetch = 0 : i64, scratch_operands = 0 : i64, tpu.core_type = #tpu.core_type<tc>} {
    %c150 = arith.constant 150 : index
    %c0 = arith.constant 0 : index
    %0 = vector.load %arg3[%c150, %c0] : memref<168x128xf32, #tpu.memory_space<vmem>>, vector<16x16xf32>
    %c0_0 = arith.constant 0 : index
    %c0_1 = arith.constant 0 : index
    %1 = vector.load %arg3[%c0_0, %c0_1] : memref<168x128xf32, #tpu.memory_space<vmem>>, vector<1x12xf32>
    %c1 = arith.constant 1 : index
    %c0_2 = arith.constant 0 : index
    %2 = vector.load %arg3[%c1, %c0_2] : memref<168x128xf32, #tpu.memory_space<vmem>>, vector<1x12xf32>
    %c2 = arith.constant 2 : index
    %c0_3 = arith.constant 0 : index
    %3 = vector.load %arg3[%c2, %c0_3] : memref<168x128xf32, #tpu.memory_space<vmem>>, vector<12x32xf32>
    %c14 = arith.constant 14 : index
    %c0_4 = arith.constant 0 : index
    %4 = vector.load %arg3[%c14, %c0_4] : memref<168x128xf32, #tpu.memory_space<vmem>>, vector<1x32xf32>
    %c15 = arith.constant 15 : index
    %c0_5 = arith.constant 0 : index
    %5 = vector.load %arg3[%c15, %c0_5] : memref<168x128xf32, #tpu.memory_space<vmem>>, vector<1x32xf32>
    %c16 = arith.constant 16 : index
    %c0_6 = arith.constant 0 : index
    %6 = vector.load %arg3[%c16, %c0_6] : memref<168x128xf32, #tpu.memory_space<vmem>>, vector<1x32xf32>
    %c17 = arith.constant 17 : index
    %c0_7 = arith.constant 0 : index
    %7 = vector.load %arg3[%c17, %c0_7] : memref<168x128xf32, #tpu.memory_space<vmem>>, vector<32x16xf32>
    %c49 = arith.constant 49 : index
    %c0_8 = arith.constant 0 : index
    %8 = vector.load %arg3[%c49, %c0_8] : memref<168x128xf32, #tpu.memory_space<vmem>>, vector<1x16xf32>
    %c0_9 = arith.constant 0 : index
    %c0_10 = arith.constant 0 : index
    %9 = vector.load %arg0[%c0_9, %c0_10] : memref<8x12xf32, #tpu.memory_space<vmem>>, vector<8x12xf32>
    %cst = arith.constant dense<0.000000e+00> : vector<12xf32>
    %10 = vector.multi_reduction <add>, %9, %cst [0] : vector<8x12xf32> to vector<12xf32>
    %11 = vector.shape_cast %10 : vector<12xf32> to vector<1x12xf32>
    %cst_11 = arith.constant 8.000000e+00 : f32
    %12 = vector.broadcast %cst_11 : f32 to vector<1x12xf32>
    %13 = arith.divf %11, %12 : vector<1x12xf32>
    %14 = vector.broadcast %13 : vector<1x12xf32> to vector<8x12xf32>
    %15 = arith.subf %9, %14 : vector<8x12xf32>
    %16 = arith.mulf %15, %15 : vector<8x12xf32>
    %cst_12 = arith.constant dense<0.000000e+00> : vector<12xf32>
    %17 = vector.multi_reduction <add>, %16, %cst_12 [0] : vector<8x12xf32> to vector<12xf32>
    %18 = vector.shape_cast %17 : vector<12xf32> to vector<1x12xf32>
    %cst_13 = arith.constant 8.000000e+00 : f32
    %19 = vector.broadcast %cst_13 : f32 to vector<1x12xf32>
    %20 = arith.divf %18, %19 : vector<1x12xf32>
    %cst_14 = arith.constant 9.99999974E-6 : f32
    %21 = vector.broadcast %cst_14 : f32 to vector<1x12xf32>
    %22 = arith.addf %20, %21 : vector<1x12xf32>
    %23 = math.rsqrt %22 : vector<1x12xf32>
    %24 = arith.mulf %1, %23 : vector<1x12xf32>
    %25 = vector.broadcast %24 : vector<1x12xf32> to vector<8x12xf32>
    %26 = arith.mulf %15, %25 : vector<8x12xf32>
    %27 = vector.broadcast %2 : vector<1x12xf32> to vector<8x12xf32>
    %28 = arith.addf %26, %27 : vector<8x12xf32>
    %cst_15 = arith.constant dense<0.000000e+00> : vector<8x32xf32>
    %29 = tpu.matmul %28, %3, %cst_15 {dimension_numbers = #tpu.dot_dimension_numbers<[1], [0], [0], [1], [0, 0, 1, 1], [], []>} : vector<8x12xf32>, vector<12x32xf32>, vector<8x32xf32> -> vector<8x32xf32>
    %30 = vector.broadcast %4 : vector<1x32xf32> to vector<8x32xf32>
    %31 = arith.addf %29, %30 : vector<8x32xf32>
    %cst_16 = arith.constant 0.000000e+00 : f32
    %32 = vector.broadcast %cst_16 : f32 to vector<8x32xf32>
    %33 = arith.maximumf %31, %32 : vector<8x32xf32>
    %cst_17 = arith.constant dense<0.000000e+00> : vector<32xf32>
    %34 = vector.multi_reduction <add>, %33, %cst_17 [0] : vector<8x32xf32> to vector<32xf32>
    %35 = vector.shape_cast %34 : vector<32xf32> to vector<1x32xf32>
    %cst_18 = arith.constant 8.000000e+00 : f32
    %36 = vector.broadcast %cst_18 : f32 to vector<1x32xf32>
    %37 = arith.divf %35, %36 : vector<1x32xf32>
    %38 = vector.broadcast %37 : vector<1x32xf32> to vector<8x32xf32>
    %39 = arith.subf %33, %38 : vector<8x32xf32>
    %40 = arith.mulf %39, %39 : vector<8x32xf32>
    %cst_19 = arith.constant dense<0.000000e+00> : vector<32xf32>
    %41 = vector.multi_reduction <add>, %40, %cst_19 [0] : vector<8x32xf32> to vector<32xf32>
    %42 = vector.shape_cast %41 : vector<32xf32> to vector<1x32xf32>
    %cst_20 = arith.constant 8.000000e+00 : f32
    %43 = vector.broadcast %cst_20 : f32 to vector<1x32xf32>
    %44 = arith.divf %42, %43 : vector<1x32xf32>
    %cst_21 = arith.constant 9.99999974E-6 : f32
    %45 = vector.broadcast %cst_21 : f32 to vector<1x32xf32>
    %46 = arith.addf %44, %45 : vector<1x32xf32>
    %47 = math.rsqrt %46 : vector<1x32xf32>
    %48 = arith.mulf %5, %47 : vector<1x32xf32>
    %49 = vector.broadcast %48 : vector<1x32xf32> to vector<8x32xf32>
    %50 = arith.mulf %39, %49 : vector<8x32xf32>
    %51 = vector.broadcast %6 : vector<1x32xf32> to vector<8x32xf32>
    %52 = arith.addf %50, %51 : vector<8x32xf32>
    %cst_22 = arith.constant dense<0.000000e+00> : vector<8x16xf32>
    %53 = tpu.matmul %52, %7, %cst_22 {dimension_numbers = #tpu.dot_dimension_numbers<[1], [0], [0], [1], [0, 0, 1, 1], [], []>} : vector<8x32xf32>, vector<32x16xf32>, vector<8x16xf32> -> vector<8x16xf32>
    %54 = vector.broadcast %8 : vector<1x16xf32> to vector<8x16xf32>
    %55 = arith.addf %53, %54 : vector<8x16xf32>
    %c50 = arith.constant 50 : index
    %c0_23 = arith.constant 0 : index
    %56 = vector.load %arg3[%c50, %c0_23] : memref<168x128xf32, #tpu.memory_space<vmem>>, vector<1x10xf32>
    %c51 = arith.constant 51 : index
    %c0_24 = arith.constant 0 : index
    %57 = vector.load %arg3[%c51, %c0_24] : memref<168x128xf32, #tpu.memory_space<vmem>>, vector<1x10xf32>
    %c52 = arith.constant 52 : index
    %c0_25 = arith.constant 0 : index
    %58 = vector.load %arg3[%c52, %c0_25] : memref<168x128xf32, #tpu.memory_space<vmem>>, vector<10x32xf32>
    %c62 = arith.constant 62 : index
    %c0_26 = arith.constant 0 : index
    %59 = vector.load %arg3[%c62, %c0_26] : memref<168x128xf32, #tpu.memory_space<vmem>>, vector<1x32xf32>
    %c63 = arith.constant 63 : index
    %c0_27 = arith.constant 0 : index
    %60 = vector.load %arg3[%c63, %c0_27] : memref<168x128xf32, #tpu.memory_space<vmem>>, vector<1x32xf32>
    %c64 = arith.constant 64 : index
    %c0_28 = arith.constant 0 : index
    %61 = vector.load %arg3[%c64, %c0_28] : memref<168x128xf32, #tpu.memory_space<vmem>>, vector<1x32xf32>
    %c65 = arith.constant 65 : index
    %c0_29 = arith.constant 0 : index
    %62 = vector.load %arg3[%c65, %c0_29] : memref<168x128xf32, #tpu.memory_space<vmem>>, vector<32x16xf32>
    %c97 = arith.constant 97 : index
    %c0_30 = arith.constant 0 : index
    %63 = vector.load %arg3[%c97, %c0_30] : memref<168x128xf32, #tpu.memory_space<vmem>>, vector<1x16xf32>
    %c0_31 = arith.constant 0 : index
    %c0_32 = arith.constant 0 : index
    %64 = vector.load %arg1[%c0_31, %c0_32] : memref<8x10xf32, #tpu.memory_space<vmem>>, vector<8x10xf32>
    %cst_33 = arith.constant dense<0.000000e+00> : vector<10xf32>
    %65 = vector.multi_reduction <add>, %64, %cst_33 [0] : vector<8x10xf32> to vector<10xf32>
    %66 = vector.shape_cast %65 : vector<10xf32> to vector<1x10xf32>
    %cst_34 = arith.constant 8.000000e+00 : f32
    %67 = vector.broadcast %cst_34 : f32 to vector<1x10xf32>
    %68 = arith.divf %66, %67 : vector<1x10xf32>
    %69 = vector.broadcast %68 : vector<1x10xf32> to vector<8x10xf32>
    %70 = arith.subf %64, %69 : vector<8x10xf32>
    %71 = arith.mulf %70, %70 : vector<8x10xf32>
    %cst_35 = arith.constant dense<0.000000e+00> : vector<10xf32>
    %72 = vector.multi_reduction <add>, %71, %cst_35 [0] : vector<8x10xf32> to vector<10xf32>
    %73 = vector.shape_cast %72 : vector<10xf32> to vector<1x10xf32>
    %cst_36 = arith.constant 8.000000e+00 : f32
    %74 = vector.broadcast %cst_36 : f32 to vector<1x10xf32>
    %75 = arith.divf %73, %74 : vector<1x10xf32>
    %cst_37 = arith.constant 9.99999974E-6 : f32
    %76 = vector.broadcast %cst_37 : f32 to vector<1x10xf32>
    %77 = arith.addf %75, %76 : vector<1x10xf32>
    %78 = math.rsqrt %77 : vector<1x10xf32>
    %79 = arith.mulf %56, %78 : vector<1x10xf32>
    %80 = vector.broadcast %79 : vector<1x10xf32> to vector<8x10xf32>
    %81 = arith.mulf %70, %80 : vector<8x10xf32>
    %82 = vector.broadcast %57 : vector<1x10xf32> to vector<8x10xf32>
    %83 = arith.addf %81, %82 : vector<8x10xf32>
    %cst_38 = arith.constant dense<0.000000e+00> : vector<8x32xf32>
    %84 = tpu.matmul %83, %58, %cst_38 {dimension_numbers = #tpu.dot_dimension_numbers<[1], [0], [0], [1], [0, 0, 1, 1], [], []>} : vector<8x10xf32>, vector<10x32xf32>, vector<8x32xf32> -> vector<8x32xf32>
    %85 = vector.broadcast %59 : vector<1x32xf32> to vector<8x32xf32>
    %86 = arith.addf %84, %85 : vector<8x32xf32>
    %cst_39 = arith.constant 0.000000e+00 : f32
    %87 = vector.broadcast %cst_39 : f32 to vector<8x32xf32>
    %88 = arith.maximumf %86, %87 : vector<8x32xf32>
    %cst_40 = arith.constant dense<0.000000e+00> : vector<32xf32>
    %89 = vector.multi_reduction <add>, %88, %cst_40 [0] : vector<8x32xf32> to vector<32xf32>
    %90 = vector.shape_cast %89 : vector<32xf32> to vector<1x32xf32>
    %cst_41 = arith.constant 8.000000e+00 : f32
    %91 = vector.broadcast %cst_41 : f32 to vector<1x32xf32>
    %92 = arith.divf %90, %91 : vector<1x32xf32>
    %93 = vector.broadcast %92 : vector<1x32xf32> to vector<8x32xf32>
    %94 = arith.subf %88, %93 : vector<8x32xf32>
    %95 = arith.mulf %94, %94 : vector<8x32xf32>
    %cst_42 = arith.constant dense<0.000000e+00> : vector<32xf32>
    %96 = vector.multi_reduction <add>, %95, %cst_42 [0] : vector<8x32xf32> to vector<32xf32>
    %97 = vector.shape_cast %96 : vector<32xf32> to vector<1x32xf32>
    %cst_43 = arith.constant 8.000000e+00 : f32
    %98 = vector.broadcast %cst_43 : f32 to vector<1x32xf32>
    %99 = arith.divf %97, %98 : vector<1x32xf32>
    %cst_44 = arith.constant 9.99999974E-6 : f32
    %100 = vector.broadcast %cst_44 : f32 to vector<1x32xf32>
    %101 = arith.addf %99, %100 : vector<1x32xf32>
    %102 = math.rsqrt %101 : vector<1x32xf32>
    %103 = arith.mulf %60, %102 : vector<1x32xf32>
    %104 = vector.broadcast %103 : vector<1x32xf32> to vector<8x32xf32>
    %105 = arith.mulf %94, %104 : vector<8x32xf32>
    %106 = vector.broadcast %61 : vector<1x32xf32> to vector<8x32xf32>
    %107 = arith.addf %105, %106 : vector<8x32xf32>
    %cst_45 = arith.constant dense<0.000000e+00> : vector<8x16xf32>
    %108 = tpu.matmul %107, %62, %cst_45 {dimension_numbers = #tpu.dot_dimension_numbers<[1], [0], [0], [1], [0, 0, 1, 1], [], []>} : vector<8x32xf32>, vector<32x16xf32>, vector<8x16xf32> -> vector<8x16xf32>
    %109 = vector.broadcast %63 : vector<1x16xf32> to vector<8x16xf32>
    %110 = arith.addf %108, %109 : vector<8x16xf32>
    %c98 = arith.constant 98 : index
    %c0_46 = arith.constant 0 : index
    %111 = vector.load %arg3[%c98, %c0_46] : memref<168x128xf32, #tpu.memory_space<vmem>>, vector<1x14xf32>
    %c99 = arith.constant 99 : index
    %c0_47 = arith.constant 0 : index
    %112 = vector.load %arg3[%c99, %c0_47] : memref<168x128xf32, #tpu.memory_space<vmem>>, vector<1x14xf32>
    %c100 = arith.constant 100 : index
    %c0_48 = arith.constant 0 : index
    %113 = vector.load %arg3[%c100, %c0_48] : memref<168x128xf32, #tpu.memory_space<vmem>>, vector<14x32xf32>
    %c114 = arith.constant 114 : index
    %c0_49 = arith.constant 0 : index
    %114 = vector.load %arg3[%c114, %c0_49] : memref<168x128xf32, #tpu.memory_space<vmem>>, vector<1x32xf32>
    %c115 = arith.constant 115 : index
    %c0_50 = arith.constant 0 : index
    %115 = vector.load %arg3[%c115, %c0_50] : memref<168x128xf32, #tpu.memory_space<vmem>>, vector<1x32xf32>
    %c116 = arith.constant 116 : index
    %c0_51 = arith.constant 0 : index
    %116 = vector.load %arg3[%c116, %c0_51] : memref<168x128xf32, #tpu.memory_space<vmem>>, vector<1x32xf32>
    %c117 = arith.constant 117 : index
    %c0_52 = arith.constant 0 : index
    %117 = vector.load %arg3[%c117, %c0_52] : memref<168x128xf32, #tpu.memory_space<vmem>>, vector<32x16xf32>
    %c149 = arith.constant 149 : index
    %c0_53 = arith.constant 0 : index
    %118 = vector.load %arg3[%c149, %c0_53] : memref<168x128xf32, #tpu.memory_space<vmem>>, vector<1x16xf32>
    %c0_54 = arith.constant 0 : index
    %c0_55 = arith.constant 0 : index
    %119 = vector.load %arg2[%c0_54, %c0_55] : memref<8x14xf32, #tpu.memory_space<vmem>>, vector<8x14xf32>
    %cst_56 = arith.constant dense<0.000000e+00> : vector<14xf32>
    %120 = vector.multi_reduction <add>, %119, %cst_56 [0] : vector<8x14xf32> to vector<14xf32>
    %121 = vector.shape_cast %120 : vector<14xf32> to vector<1x14xf32>
    %cst_57 = arith.constant 8.000000e+00 : f32
    %122 = vector.broadcast %cst_57 : f32 to vector<1x14xf32>
    %123 = arith.divf %121, %122 : vector<1x14xf32>
    %124 = vector.broadcast %123 : vector<1x14xf32> to vector<8x14xf32>
    %125 = arith.subf %119, %124 : vector<8x14xf32>
    %126 = arith.mulf %125, %125 : vector<8x14xf32>
    %cst_58 = arith.constant dense<0.000000e+00> : vector<14xf32>
    %127 = vector.multi_reduction <add>, %126, %cst_58 [0] : vector<8x14xf32> to vector<14xf32>
    %128 = vector.shape_cast %127 : vector<14xf32> to vector<1x14xf32>
    %cst_59 = arith.constant 8.000000e+00 : f32
    %129 = vector.broadcast %cst_59 : f32 to vector<1x14xf32>
    %130 = arith.divf %128, %129 : vector<1x14xf32>
    %cst_60 = arith.constant 9.99999974E-6 : f32
    %131 = vector.broadcast %cst_60 : f32 to vector<1x14xf32>
    %132 = arith.addf %130, %131 : vector<1x14xf32>
    %133 = math.rsqrt %132 : vector<1x14xf32>
    %134 = arith.mulf %111, %133 : vector<1x14xf32>
    %135 = vector.broadcast %134 : vector<1x14xf32> to vector<8x14xf32>
    %136 = arith.mulf %125, %135 : vector<8x14xf32>
    %137 = vector.broadcast %112 : vector<1x14xf32> to vector<8x14xf32>
    %138 = arith.addf %136, %137 : vector<8x14xf32>
    %cst_61 = arith.constant dense<0.000000e+00> : vector<8x32xf32>
    %139 = tpu.matmul %138, %113, %cst_61 {dimension_numbers = #tpu.dot_dimension_numbers<[1], [0], [0], [1], [0, 0, 1, 1], [], []>} : vector<8x14xf32>, vector<14x32xf32>, vector<8x32xf32> -> vector<8x32xf32>
    %140 = vector.broadcast %114 : vector<1x32xf32> to vector<8x32xf32>
    %141 = arith.addf %139, %140 : vector<8x32xf32>
    %cst_62 = arith.constant 0.000000e+00 : f32
    %142 = vector.broadcast %cst_62 : f32 to vector<8x32xf32>
    %143 = arith.maximumf %141, %142 : vector<8x32xf32>
    %cst_63 = arith.constant dense<0.000000e+00> : vector<32xf32>
    %144 = vector.multi_reduction <add>, %143, %cst_63 [0] : vector<8x32xf32> to vector<32xf32>
    %145 = vector.shape_cast %144 : vector<32xf32> to vector<1x32xf32>
    %cst_64 = arith.constant 8.000000e+00 : f32
    %146 = vector.broadcast %cst_64 : f32 to vector<1x32xf32>
    %147 = arith.divf %145, %146 : vector<1x32xf32>
    %148 = vector.broadcast %147 : vector<1x32xf32> to vector<8x32xf32>
    %149 = arith.subf %143, %148 : vector<8x32xf32>
    %150 = arith.mulf %149, %149 : vector<8x32xf32>
    %cst_65 = arith.constant dense<0.000000e+00> : vector<32xf32>
    %151 = vector.multi_reduction <add>, %150, %cst_65 [0] : vector<8x32xf32> to vector<32xf32>
    %152 = vector.shape_cast %151 : vector<32xf32> to vector<1x32xf32>
    %cst_66 = arith.constant 8.000000e+00 : f32
    %153 = vector.broadcast %cst_66 : f32 to vector<1x32xf32>
    %154 = arith.divf %152, %153 : vector<1x32xf32>
    %cst_67 = arith.constant 9.99999974E-6 : f32
    %155 = vector.broadcast %cst_67 : f32 to vector<1x32xf32>
    %156 = arith.addf %154, %155 : vector<1x32xf32>
    %157 = math.rsqrt %156 : vector<1x32xf32>
    %158 = arith.mulf %115, %157 : vector<1x32xf32>
    %159 = vector.broadcast %158 : vector<1x32xf32> to vector<8x32xf32>
    %160 = arith.mulf %149, %159 : vector<8x32xf32>
    %161 = vector.broadcast %116 : vector<1x32xf32> to vector<8x32xf32>
    %162 = arith.addf %160, %161 : vector<8x32xf32>
    %cst_68 = arith.constant dense<0.000000e+00> : vector<8x16xf32>
    %163 = tpu.matmul %162, %117, %cst_68 {dimension_numbers = #tpu.dot_dimension_numbers<[1], [0], [0], [1], [0, 0, 1, 1], [], []>} : vector<8x32xf32>, vector<32x16xf32>, vector<8x16xf32> -> vector<8x16xf32>
    %164 = vector.broadcast %118 : vector<1x16xf32> to vector<8x16xf32>
    %165 = arith.addf %163, %164 : vector<8x16xf32>
    %166 = tpu.concatenate %55, %110, %165 in 0 : vector<8x16xf32>, vector<8x16xf32>, vector<8x16xf32> -> vector<24x16xf32>
    %cst_69 = arith.constant dense<0xFF800000> : vector<24xf32>
    %167 = vector.multi_reduction <maximumf>, %166, %cst_69 [1] : vector<24x16xf32> to vector<24xf32>
    %168 = vector.shape_cast %167 : vector<24xf32> to vector<24x1xf32>
    %169 = vector.broadcast %168 : vector<24x1xf32> to vector<24x16xf32>
    %170 = arith.subf %166, %169 : vector<24x16xf32>
    %171 = math.exp %170 : vector<24x16xf32>
    %cst_70 = arith.constant dense<0.000000e+00> : vector<24xf32>
    %172 = vector.multi_reduction <add>, %171, %cst_70 [1] : vector<24x16xf32> to vector<24xf32>
    %173 = vector.shape_cast %172 : vector<24xf32> to vector<24x1xf32>
    %174 = math.log %173 : vector<24x1xf32>
    %175 = vector.broadcast %174 : vector<24x1xf32> to vector<24x16xf32>
    %176 = arith.subf %170, %175 : vector<24x16xf32>
    %177 = vector.extract_strided_slice %176 {offsets = [0, 0], sizes = [8, 16], strides = [1, 1]} : vector<24x16xf32> to vector<8x16xf32>
    %178 = vector.extract_strided_slice %176 {offsets = [8, 0], sizes = [8, 16], strides = [1, 1]} : vector<24x16xf32> to vector<8x16xf32>
    %179 = vector.extract_strided_slice %176 {offsets = [16, 0], sizes = [8, 16], strides = [1, 1]} : vector<24x16xf32> to vector<8x16xf32>
    %cst_71 = arith.constant dense<0.000000e+00> : vector<24x16xf32>
    %180 = tpu.matmul %166, %0, %cst_71 {dimension_numbers = #tpu.dot_dimension_numbers<[1], [0], [0], [1], [0, 0, 1, 1], [], []>} : vector<24x16xf32>, vector<16x16xf32>, vector<24x16xf32> -> vector<24x16xf32>
    %cst_72 = arith.constant 0.629960536 : f32
    %181 = vector.broadcast %cst_72 : f32 to vector<24x16xf32>
    %182 = arith.mulf %180, %181 : vector<24x16xf32>
    %183 = vector.extract_strided_slice %182 {offsets = [0, 0], sizes = [8, 16], strides = [1, 1]} : vector<24x16xf32> to vector<8x16xf32>
    %184 = vector.extract_strided_slice %182 {offsets = [8, 0], sizes = [8, 16], strides = [1, 1]} : vector<24x16xf32> to vector<8x16xf32>
    %185 = arith.mulf %183, %184 : vector<8x16xf32>
    %186 = vector.extract_strided_slice %182 {offsets = [16, 0], sizes = [8, 16], strides = [1, 1]} : vector<24x16xf32> to vector<8x16xf32>
    %187 = arith.mulf %185, %186 : vector<8x16xf32>
    %cst_73 = arith.constant dense<0.000000e+00> : vector<8x16xf32>
    %188 = tpu.matmul %187, %0, %cst_73 {dimension_numbers = #tpu.dot_dimension_numbers<[1], [0], [0], [1], [0, 0, 1, 1], [], []>} : vector<8x16xf32>, vector<16x16xf32>, vector<8x16xf32> -> vector<8x16xf32>
    %cst_74 = arith.constant 2.500000e-01 : f32
    %189 = vector.broadcast %cst_74 : f32 to vector<8x16xf32>
    %190 = arith.mulf %188, %189 : vector<8x16xf32>
    %cst_75 = arith.constant dense<0xFF800000> : vector<8xf32>
    %191 = vector.multi_reduction <maximumf>, %190, %cst_75 [1] : vector<8x16xf32> to vector<8xf32>
    %192 = vector.shape_cast %191 : vector<8xf32> to vector<8x1xf32>
    %193 = vector.broadcast %192 : vector<8x1xf32> to vector<8x16xf32>
    %194 = arith.subf %190, %193 : vector<8x16xf32>
    %195 = math.exp %194 : vector<8x16xf32>
    %cst_76 = arith.constant dense<0.000000e+00> : vector<8xf32>
    %196 = vector.multi_reduction <add>, %195, %cst_76 [1] : vector<8x16xf32> to vector<8xf32>
    %197 = vector.shape_cast %196 : vector<8xf32> to vector<8x1xf32>
    %198 = math.log %197 : vector<8x1xf32>
    %199 = vector.broadcast %198 : vector<8x1xf32> to vector<8x16xf32>
    %200 = arith.subf %194, %199 : vector<8x16xf32>
    %cst_77 = arith.constant 0.000000e+00 : f32
    %201 = vector.broadcast %cst_77 : f32 to vector<8x64xf32>
    %202 = tpu.concatenate %177, %178, %179, %200, %201 in 1 : vector<8x16xf32>, vector<8x16xf32>, vector<8x16xf32>, vector<8x16xf32>, vector<8x64xf32> -> vector<8x128xf32>
    %c0_78 = arith.constant 0 : index
    %c0_79 = arith.constant 0 : index
    %203 = vector.load %arg4[%c0_78, %c0_79] : memref<8x128xf32, #tpu.memory_space<vmem>>, vector<8x128xf32>
    tpu.vector_store %arg4[%c0_78, %c0_79], %202 {strides = array<i32>} : memref<8x128xf32, #tpu.memory_space<vmem>>, vector<8x128xf32>,
    return
  }
}

</mosaic_0001>

<llo_original>
// kernel: groupnet_forward.1
$region0: #{groupnet_forward.1}
  #allocation0 [shape = 'u32[]', space=smem, size = 0x4, offset = 0x4, fixed_abs, tag = 'smem constant byte address 0x4 - core index']
  #allocation1 [shape = 'u32[144,128]{1,0:T(1,128)}', space=vmem, size = 0x12000, scoped, tag = 'internal scratch']
  %s0 = inlined_call_operand.hbm [shape: f32[8,12], index: 0, kind: input, shape index: {}]
  %s1 = inlined_call_operand.hbm [shape: f32[8,10], index: 1, kind: input, shape index: {}]
  %s2 = inlined_call_operand.hbm [shape: f32[8,14], index: 2, kind: input, shape index: {}]
  %s3 = inlined_call_operand.hbm [shape: f32[168,128], index: 3, kind: input, shape index: {}]
  %s4 = inlined_call_operand.vmem [shape: f32[8,128], index: 4, kind: output, shape index: {}]
  %s5 = sld [smem:[#allocation0]]
  $region42: #{groupnet_forward.1} parent=0
    _
  %s7 = ssub.s32 1, %s5
  %s8 = scalar_select 0, %s7, %s5
  $region1: #{groupnet_forward.1} parent=0
    #allocation2 [shape = 'u8[4096]{0}', space=vmem, size = 0x1000, scoped, tag = 'input window, operand 0, single buffered']
    #allocation3 [shape = 's32[1]{0}', space=sflag, size = 0x4, scoped, tag = 'scoped memory for groupnet_forward.1']
    #allocation4 [shape = 'u8[4096]{0}', space=vmem, size = 0x1000, scoped, tag = 'input window, operand 1, single buffered']
    #allocation5 [shape = 's32[1]{0}', space=sflag, size = 0x4, scoped, tag = 'scoped memory for groupnet_forward.1']
    #allocation6 [shape = 'u8[4096]{0}', space=vmem, size = 0x1000, scoped, tag = 'input window, operand 2, single buffered']
    #allocation7 [shape = 'u8[86016]{0}', space=vmem, size = 0x15000, scoped, tag = 'input window, operand 3, single buffered']
    #allocation8 [shape = 's32[1]{0}', space=sflag, size = 0x4, scoped, tag = 'scoped memory for groupnet_forward.1']
    %9 = vsyncpa [#allocation3], 0
    %10 = vsyncpa [#allocation5], 0
    %11 = vsyncpa [#allocation8], 0
    // Predicated region
    $region2: #{groupnet_forward.1} parent=1 // pred_check
      _
    $region3: #{groupnet_forward.1} parent=1 // pred_check_branch
      %13 = sbr.rel (0) target = $region5
    $region4: #{groupnet_forward.1} parent=1 // pred_region
      %s15 = ssub.s32 128, 128
      %16 = vsyncadd [#allocation3], %s15
      %s18 = sshll.u32 [#allocation2], 4
      %s19 = int_to_ptr.vmem [resolvable:$true] %s18
      %21 = dma.hbm_to_vmem [thread:$0]  %s0, 128, %s19, [#allocation3]
    $region5: #{groupnet_forward.1} parent=1 // pred_fallthru
      _
    // Predicated region
    $region6: #{groupnet_forward.1} parent=1 // pred_check
      _
    $region7: #{groupnet_forward.1} parent=1 // pred_check_branch
      %23 = sbr.rel (0) target = $region9
    $region8: #{groupnet_forward.1} parent=1 // pred_region
      %s25 = ssub.s32 128, 128
      %26 = vsyncadd [#allocation5], %s25
      %s28 = sshll.u32 [#allocation4], 4
      %s29 = int_to_ptr.vmem [resolvable:$true] %s28
      %31 = dma.hbm_to_vmem [thread:$0]  %s1, 128, %s29, [#allocation5]
    $region9: #{groupnet_forward.1} parent=1 // pred_fallthru
      _
    // Predicated region
    $region10: #{groupnet_forward.1} parent=1 // pred_check
      _
    $region11: #{groupnet_forward.1} parent=1 // pred_check_branch
      %33 = sbr.rel (0) target = $region13
    $region12: #{groupnet_forward.1} parent=1 // pred_region
      %s35 = ssub.s32 128, 128
      %36 = vsyncadd [#allocation5], %s35
      %s38 = sshll.u32 [#allocation6], 4
      %s39 = int_to_ptr.vmem [resolvable:$true] %s38
      %41 = dma.hbm_to_vmem [thread:$0]  %s2, 128, %s39, [#allocation5]
    $region13: #{groupnet_forward.1} parent=1 // pred_fallthru
      _
    // Predicated region
    $region14: #{groupnet_forward.1} parent=1 // pred_check
      _
    $region15: #{groupnet_forward.1} parent=1 // pred_check_branch
      %43 = sbr.rel (0) target = $region17
    $region16: #{groupnet_forward.1} parent=1 // pred_region
      %s45 = ssub.s32 2688, 2688
      %46 = vsyncadd [#allocation8], %s45
      %s47 = sshll.u32 [#allocation7], 4
      %s48 = int_to_ptr.vmem [resolvable:$true] %s47
      %53 = dma.hbm_to_vmem [thread:$0]  %s3, 2688, %s48, [#allocation8], 128, 128, 8
    $region17: #{groupnet_forward.1} parent=1 // pred_fallthru
      _
    // Predicated region
    $region18: #{groupnet_forward.1} parent=1 // pred_check
      _
    $region19: #{groupnet_forward.1} parent=1 // pred_check_branch
      %55 = sbr.rel (0) target = $region21
    $region20: #{groupnet_forward.1} parent=1 // pred_region
      %56 = dma.done [#allocation3], 128
    $region21: #{groupnet_forward.1} parent=1 // pred_fallthru
      _
    // Predicated region
    $region22: #{groupnet_forward.1} parent=1 // pred_check
      _
    $region23: #{groupnet_forward.1} parent=1 // pred_check_branch
      %58 = sbr.rel (0) target = $region25
    $region24: #{groupnet_forward.1} parent=1 // pred_region
      %59 = dma.done [#allocation5], 128
    $region25: #{groupnet_forward.1} parent=1 // pred_fallthru
      _
    // Predicated region
    $region26: #{groupnet_forward.1} parent=1 // pred_check
      _
    $region27: #{groupnet_forward.1} parent=1 // pred_check_branch
      %61 = sbr.rel (0) target = $region29
    $region28: #{groupnet_forward.1} parent=1 // pred_region
      %62 = dma.done [#allocation5], 128
    $region29: #{groupnet_forward.1} parent=1 // pred_fallthru
      _
    // Predicated region
    $region30: #{groupnet_forward.1} parent=1 // pred_check
      _
    $region31: #{groupnet_forward.1} parent=1 // pred_check_branch
      %64 = sbr.rel (0) target = $region33
    $region32: #{groupnet_forward.1} parent=1 // pred_region
      %65 = dma.done [#allocation8], 2688
    $region33: #{groupnet_forward.1} parent=1 // pred_fallthru
      _
    %v66 = vld [vmem:[#allocation7 + $0x96] sm:$0xff]
    %v67 = vld [vmem:[#allocation7 + $0x9e] sm:$0xff]
    %v68 = vld [vmem:[#allocation7] sm:$0x1]
    %v69 = vld [vmem:[#allocation7 + $0x1] sm:$0x1]
    %v70 = vld [vmem:[#allocation7 + $0x2] sm:$0xff]
    %v71 = vld [vmem:[#allocation7 + $0xa] sm:$0xf]
    %v72 = vld [vmem:[#allocation7 + $0xe] sm:$0x1]
    %v73 = vld [vmem:[#allocation7 + $0xf] sm:$0x1]
    %v74 = vld [vmem:[#allocation7 + $0x10] sm:$0x1]
    %v75 = vld [vmem:[#allocation7 + $0x11] sm:$0xff]
    %v76 = vld [vmem:[#allocation7 + $0x19] sm:$0xff]
    %v77 = vld [vmem:[#allocation7 + $0x21] sm:$0xff]
    %v78 = vld [vmem:[#allocation7 + $0x29] sm:$0xff]
    %v79 = vld [vmem:[#allocation7 + $0x31] sm:$0x1]
    %v80 = vld [vmem:[#allocation2] sm:$0xff]
    %vm81 = vcmask 97280
    %v82 = vsel %vm81, %v80, 0.0
    %v83 = vrot.slane %v82, 4
    %v84 = vadd.f32 %v82, %v83
    %v85 = vrot.slane %v84, 2
    %v86 = vadd.f32 %v84, %v85
    %v87 = vrot.slane %v86, 1
    %v88 = vadd.f32 %v86, %v87
    %v89 = vrcp.pop 8.0
    %v90 = vmul.f32 %v88, %v89
    %v91 = vsub.f32 %v80, %v90
    %v92 = vmul.f32 %v91, %v91
    %v93 = vsel %vm81, %v92, 0.0
    %v94 = vrot.slane %v93, 4
    %v95 = vadd.f32 %v93, %v94
    %v96 = vrot.slane %v95, 2
    %v97 = vadd.f32 %v95, %v96
    %v98 = vrot.slane %v97, 1
    %v99 = vadd.f32 %v97, %v98
    %v100 = vmul.f32 %v99, %v89
    %v101 = vadd.f32 %v100, 1e-05
    %v102 = vrsqrt.pop %v101
    %v103 = vmul.f32 %v68, %v102
    %v104 = vlaneseq
    %v105 = vshrl.u32 %v104, 7
    %v106 = vsub.s32 0, %v105
    %v107 = vrot.slane %v103, %v106
    %v108 = vmul.f32 %v91, %v107
    %v109 = vlaneseq
    %v110 = vshrl.u32 %v109, 7
    %v111 = vsub.s32 0, %v110
    %v112 = vrot.slane %v69, %v111
    %v113 = vadd.f32 %v108, %v112
    %v114 = vlaneseq
    %v115 = vshrl.u32 %v114, 7
    %v116 = vsub.s32 0, %v115
    %v117 = vrot.slane %v72, %v116
    %v119 = vsel %vm81, %v113, 0
    %vm121 = vcmask 1043456
    %v123 = vsel %vm121, %v71, 0
    %125 = vmatprep.subr.mxu0 0.0
    %126 = vmatpush1.msra.mxu0 %v70
    %127 = vmatprep.subr.mxu0 0.0
    %128 = vmatpush1.msra.mxu0 %v123
    %129 = vmatprep.subr.mxu0 0.0
    %130 = vmatpush1.msra.mxu0 0.0
    %131 = vmatprep.subr.mxu0 0.0
    %132 = vmatpush1.msra.mxu0 0.0
    %133 = vmatprep.subr.mxu0 0.0
    %134 = vmatpush1.msra.mxu0 0.0
    %135 = vmatprep.subr.mxu0 0.0
    %136 = vmatpush1.msra.mxu0 0.0
    %137 = vmatprep.subr.mxu0 0.0
    %138 = vmatpush1.msra.mxu0 0.0
    %139 = vmatprep.subr.mxu0 0.0
    %140 = vmatpush1.msra.mxu0 0.0
    %141 = vmatprep.subr.mxu0 0.0
    %142 = vmatpush1.msra.mxu0 0.0
    %143 = vmatprep.subr.mxu0 0.0
    %144 = vmatpush1.msra.mxu0 0.0
    %145 = vmatprep.subr.mxu0 0.0
    %146 = vmatpush1.msra.mxu0 0.0
    %147 = vmatprep.subr.mxu0 0.0
    %148 = vmatpush1.msra.mxu0 0.0
    %149 = vmatprep.subr.mxu0 0.0
    %150 = vmatpush1.msra.mxu0 0.0
    %151 = vmatprep.subr.mxu0 0.0
    %152 = vmatpush1.msra.mxu0 0.0
    %153 = vmatprep.subr.mxu0 0.0
    %154 = vmatpush1.msra.mxu0 0.0
    %155 = vmatprep.subr.mxu0 0.0
    %156 = vmatpush1.msra.mxu0 0.0
    %157 = vmatprep.subr.mxu0 0.0
    %158 = vmatpush1.msra.mxu0 0.0
    %159 = vmatprep.subr.mxu0 0.0
    %160 = vmatpush1.msra.mxu0 0.0
    %161 = vmatprep.subr.mxu0 0.0
    %162 = vmatpush1.msra.mxu0 0.0
    %163 = vmatprep.subr.mxu0 0.0
    %164 = vmatpush1.msra.mxu0 0.0
    %165 = vmatprep.subr.mxu0 0.0
    %166 = vmatpush1.msra.mxu0 0.0
    %167 = vmatprep.subr.mxu0 0.0
    %168 = vmatpush1.msra.mxu0 0.0
    %169 = vmatprep.subr.mxu0 0.0
    %170 = vmatpush1.msra.mxu0 0.0
    %171 = vmatprep.subr.mxu0 0.0
    %172 = vmatpush1.msra.mxu0 0.0
    %173 = vmatprep.subr.mxu0 0.0
    %174 = vmatpush1.msra.mxu0 0.0
    %175 = vmatprep.subr.mxu0 0.0
    %176 = vmatpush1.msra.mxu0 0.0
    %177 = vmatprep.subr.mxu0 0.0
    %178 = vmatpush1.msra.mxu0 0.0
    %179 = vmatprep.subr.mxu0 0.0
    %180 = vmatpush1.msra.mxu0 0.0
    %181 = vmatprep.subr.mxu0 0.0
    %182 = vmatpush1.msra.mxu0 0.0
    %183 = vmatprep.subr.mxu0 0.0
    %184 = vmatpush1.msra.mxu0 0.0
    %185 = vmatprep.subr.mxu0 0.0
    %186 = vmatpush1.msra.mxu0 0.0
    %187 = vmatprep.subr.mxu0 0.0
    %188 = vmatpush1.msra.mxu0 0.0
    %189 = vmatprep.mubr.f32.mxu0 0.0
    %190 = vmatmul.mubr.f32.gmra.mrb[0].mxu0 %v119
    %v191 = vpop.f32.mrb[0].mxu0
    %v192 = vadd.f32 %v117, %v191
    %v193 = vpop.f32.mrb[0].mxu0
    %194 = vdwg.mxu0
    %v195 = vmax.f32 %v192, 0.0
    %vm196 = vcmask 261120
    %v197 = vsel %vm196, %v195, 0.0
    %v198 = vrot.slane %v197, 4
    %v199 = vadd.f32 %v197, %v198
    %v200 = vrot.slane %v199, 2
    %v201 = vadd.f32 %v199, %v200
    %v202 = vrot.slane %v201, 1
    %v203 = vadd.f32 %v201, %v202
    %v204 = vmul.f32 %v203, %v89
    %v205 = vsub.f32 %v195, %v204
    %v206 = vmul.f32 %v205, %v205
    %v207 = vsel %vm196, %v206, 0.0
    %v208 = vrot.slane %v207, 4
    %v209 = vadd.f32 %v207, %v208
    %v210 = vrot.slane %v209, 2
    %v211 = vadd.f32 %v209, %v210
    %v212 = vrot.slane %v211, 1
    %v213 = vadd.f32 %v211, %v212
    %v214 = vmul.f32 %v213, %v89
    %v215 = vadd.f32 %v214, 1e-05
    %v216 = vrsqrt.pop %v215
    %v217 = vmul.f32 %v73, %v216
    %v218 = vlaneseq
    %v219 = vshrl.u32 %v218, 7
    %v220 = vsub.s32 0, %v219
    %v221 = vrot.slane %v217, %v220
    %v222 = vmul.f32 %v205, %v221
    %v223 = vlaneseq
    %v224 = vshrl.u32 %v223, 7
    %v225 = vsub.s32 0, %v224
    %v226 = vrot.slane %v74, %v225
    %v227 = vadd.f32 %v222, %v226
    %v228 = vlaneseq
    %v229 = vshrl.u32 %v228, 7
    %v230 = vsub.s32 0, %v229
    %v231 = vrot.slane %v79, %v230
    %v233 = vsel %vm196, %v227, 0
    %235 = vmatprep.subr.mxu0 0.0
    %236 = vmatpush1.msra.mxu0 %v75
    %237 = vmatprep.subr.mxu0 0.0
    %238 = vmatpush1.msra.mxu0 %v76
    %239 = vmatprep.subr.mxu0 0.0
    %240 = vmatpush1.msra.mxu0 %v77
    %241 = vmatprep.subr.mxu0 0.0
    %242 = vmatpush1.msra.mxu0 %v78
    %243 = vmatprep.subr.mxu0 0.0
    %244 = vmatpush1.msra.mxu0 0.0
    %245 = vmatprep.subr.mxu0 0.0
    %246 = vmatpush1.msra.mxu0 0.0
    %247 = vmatprep.subr.mxu0 0.0
    %248 = vmatpush1.msra.mxu0 0.0
    %249 = vmatprep.subr.mxu0 0.0
    %250 = vmatpush1.msra.mxu0 0.0
    %251 = vmatprep.subr.mxu0 0.0
    %252 = vmatpush1.msra.mxu0 0.0
    %253 = vmatprep.subr.mxu0 0.0
    %254 = vmatpush1.msra.mxu0 0.0
    %255 = vmatprep.subr.mxu0 0.0
    %256 = vmatpush1.msra.mxu0 0.0
    %257 = vmatprep.subr.mxu0 0.0
    %258 = vmatpush1.msra.mxu0 0.0
    %259 = vmatprep.subr.mxu0 0.0
    %260 = vmatpush1.msra.mxu0 0.0
    %261 = vmatprep.subr.mxu0 0.0
    %262 = vmatpush1.msra.mxu0 0.0
    %263 = vmatprep.subr.mxu0 0.0
    %264 = vmatpush1.msra.mxu0 0.0
    %265 = vmatprep.subr.mxu0 0.0
    %266 = vmatpush1.msra.mxu0 0.0
    %267 = vmatprep.subr.mxu0 0.0
    %268 = vmatpush1.msra.mxu0 0.0
    %269 = vmatprep.subr.mxu0 0.0
    %270 = vmatpush1.msra.mxu0 0.0
    %271 = vmatprep.subr.mxu0 0.0
    %272 = vmatpush1.msra.mxu0 0.0
    %273 = vmatprep.subr.mxu0 0.0
    %274 = vmatpush1.msra.mxu0 0.0
    %275 = vmatprep.subr.mxu0 0.0
    %276 = vmatpush1.msra.mxu0 0.0
    %277 = vmatprep.subr.mxu0 0.0
    %278 = vmatpush1.msra.mxu0 0.0
    %279 = vmatprep.subr.mxu0 0.0
    %280 = vmatpush1.msra.mxu0 0.0
    %281 = vmatprep.subr.mxu0 0.0
    %282 = vmatpush1.msra.mxu0 0.0
    %283 = vmatprep.subr.mxu0 0.0
    %284 = vmatpush1.msra.mxu0 0.0
    %285 = vmatprep.subr.mxu0 0.0
    %286 = vmatpush1.msra.mxu0 0.0
    %287 = vmatprep.subr.mxu0 0.0
    %288 = vmatpush1.msra.mxu0 0.0
    %289 = vmatprep.subr.mxu0 0.0
    %290 = vmatpush1.msra.mxu0 0.0
    %291 = vmatprep.subr.mxu0 0.0
    %292 = vmatpush1.msra.mxu0 0.0
    %293 = vmatprep.subr.mxu0 0.0
    %294 = vmatpush1.msra.mxu0 0.0
    %295 = vmatprep.subr.mxu0 0.0
    %296 = vmatpush1.msra.mxu0 0.0
    %297 = vmatprep.subr.mxu0 0.0
    %298 = vmatpush1.msra.mxu0 0.0
    %299 = vmatprep.mubr.f32.mxu0 0.0
    %300 = vmatmul.mubr.f32.gmra.mrb[0].mxu0 %v233
    %v301 = vpop.f32.mrb[0].mxu0
    %v302 = vadd.f32 %v231, %v301
    %v303 = vpop.f32.mrb[0].mxu0
    %304 = vdwg.mxu0
    %v305 = vld [vmem:[#allocation7 + $0x32] sm:$0x1]
    %v306 = vld [vmem:[#allocation7 + $0x33] sm:$0x1]
    %v307 = vld [vmem:[#allocation7 + $0x34] sm:$0xff]
    %v308 = vld [vmem:[#allocation7 + $0x3c] sm:$0x3]
    %v309 = vld [vmem:[#allocation7 + $0x3e] sm:$0x1]
    %v310 = vld [vmem:[#allocation7 + $0x3f] sm:$0x1]
    %v311 = vld [vmem:[#allocation7 + $0x40] sm:$0x1]
    %v312 = vld [vmem:[#allocation7 + $0x41] sm:$0xff]
    %v313 = vld [vmem:[#allocation7 + $0x49] sm:$0xff]
    %v314 = vld [vmem:[#allocation7 + $0x51] sm:$0xff]
    %v315 = vld [vmem:[#allocation7 + $0x59] sm:$0xff]
    %v316 = vld [vmem:[#allocation7 + $0x61] sm:$0x1]
    %v317 = vld [vmem:[#allocation4] sm:$0xff]
    %vm318 = vcmask 80896
    %v319 = vsel %vm318, %v317, 0.0
    %v320 = vrot.slane %v319, 4
    %v321 = vadd.f32 %v319, %v320
    %v322 = vrot.slane %v321, 2
    %v323 = vadd.f32 %v321, %v322
    %v324 = vrot.slane %v323, 1
    %v325 = vadd.f32 %v323, %v324
    %v326 = vmul.f32 %v325, %v89
    %v327 = vsub.f32 %v317, %v326
    %v328 = vmul.f32 %v327, %v327
    %v329 = vsel %vm318, %v328, 0.0
    %v330 = vrot.slane %v329, 4
    %v331 = vadd.f32 %v329, %v330
    %v332 = vrot.slane %v331, 2
    %v333 = vadd.f32 %v331, %v332
    %v334 = vrot.slane %v333, 1
    %v335 = vadd.f32 %v333, %v334
    %v336 = vmul.f32 %v335, %v89
    %v337 = vadd.f32 %v336, 1e-05
    %v338 = vrsqrt.pop %v337
    %v339 = vmul.f32 %v305, %v338
    %v340 = vlaneseq
    %v341 = vshrl.u32 %v340, 7
    %v342 = vsub.s32 0, %v341
    %v343 = vrot.slane %v339, %v342
    %v344 = vmul.f32 %v327, %v343
    %v345 = vlaneseq
    %v346 = vshrl.u32 %v345, 7
    %v347 = vsub.s32 0, %v346
    %v348 = vrot.slane %v306, %v347
    %v349 = vadd.f32 %v344, %v348
    %v350 = vlaneseq
    %v351 = vshrl.u32 %v350, 7
    %v352 = vsub.s32 0, %v351
    %v353 = vrot.slane %v309, %v352
    %v355 = vsel %vm318, %v349, 0
    %vm357 = vcmask 1041408
    %v359 = vsel %vm357, %v308, 0
    %361 = vmatprep.subr.mxu0 0.0
    %362 = vmatpush1.msra.mxu0 %v307
    %363 = vmatprep.subr.mxu0 0.0
    %364 = vmatpush1.msra.mxu0 %v359
    %365 = vmatprep.subr.mxu0 0.0
    %366 = vmatpush1.msra.mxu0 0.0
    %367 = vmatprep.subr.mxu0 0.0
    %368 = vmatpush1.msra.mxu0 0.0
    %369 = vmatprep.subr.mxu0 0.0
    %370 = vmatpush1.msra.mxu0 0.0
    %371 = vmatprep.subr.mxu0 0.0
    %372 = vmatpush1.msra.mxu0 0.0
    %373 = vmatprep.subr.mxu0 0.0
    %374 = vmatpush1.msra.mxu0 0.0
    %375 = vmatprep.subr.mxu0 0.0
    %376 = vmatpush1.msra.mxu0 0.0
    %377 = vmatprep.subr.mxu0 0.0
    %378 = vmatpush1.msra.mxu0 0.0
    %379 = vmatprep.subr.mxu0 0.0
    %380 = vmatpush1.msra.mxu0 0.0
    %381 = vmatprep.subr.mxu0 0.0
    %382 = vmatpush1.msra.mxu0 0.0
    %383 = vmatprep.subr.mxu0 0.0
    %384 = vmatpush1.msra.mxu0 0.0
    %385 = vmatprep.subr.mxu0 0.0
    %386 = vmatpush1.msra.mxu0 0.0
    %387 = vmatprep.subr.mxu0 0.0
    %388 = vmatpush1.msra.mxu0 0.0
    %389 = vmatprep.subr.mxu0 0.0
    %390 = vmatpush1.msra.mxu0 0.0
    %391 = vmatprep.subr.mxu0 0.0
    %392 = vmatpush1.msra.mxu0 0.0
    %393 = vmatprep.subr.mxu0 0.0
    %394 = vmatpush1.msra.mxu0 0.0
    %395 = vmatprep.subr.mxu0 0.0
    %396 = vmatpush1.msra.mxu0 0.0
    %397 = vmatprep.subr.mxu0 0.0
    %398 = vmatpush1.msra.mxu0 0.0
    %399 = vmatprep.subr.mxu0 0.0
    %400 = vmatpush1.msra.mxu0 0.0
    %401 = vmatprep.subr.mxu0 0.0
    %402 = vmatpush1.msra.mxu0 0.0
    %403 = vmatprep.subr.mxu0 0.0
    %404 = vmatpush1.msra.mxu0 0.0
    %405 = vmatprep.subr.mxu0 0.0
    %406 = vmatpush1.msra.mxu0 0.0
    %407 = vmatprep.subr.mxu0 0.0
    %408 = vmatpush1.msra.mxu0 0.0
    %409 = vmatprep.subr.mxu0 0.0
    %410 = vmatpush1.msra.mxu0 0.0
    %411 = vmatprep.subr.mxu0 0.0
    %412 = vmatpush1.msra.mxu0 0.0
    %413 = vmatprep.subr.mxu0 0.0
    %414 = vmatpush1.msra.mxu0 0.0
    %415 = vmatprep.subr.mxu0 0.0
    %416 = vmatpush1.msra.mxu0 0.0
    %417 = vmatprep.subr.mxu0 0.0
    %418 = vmatpush1.msra.mxu0 0.0
    %419 = vmatprep.subr.mxu0 0.0
    %420 = vmatpush1.msra.mxu0 0.0
    %421 = vmatprep.subr.mxu0 0.0
    %422 = vmatpush1.msra.mxu0 0.0
    %423 = vmatprep.subr.mxu0 0.0
    %424 = vmatpush1.msra.mxu0 0.0
    %425 = vmatprep.mubr.f32.mxu0 0.0
    %426 = vmatmul.mubr.f32.gmra.mrb[0].mxu0 %v355
    %v427 = vpop.f32.mrb[0].mxu0
    %v428 = vadd.f32 %v353, %v427
    %v429 = vpop.f32.mrb[0].mxu0
    %430 = vdwg.mxu0
    %v431 = vmax.f32 %v428, 0.0
    %v432 = vsel %vm196, %v431, 0.0
    %v433 = vrot.slane %v432, 4
    %v434 = vadd.f32 %v432, %v433
    %v435 = vrot.slane %v434, 2
    %v436 = vadd.f32 %v434, %v435
    %v437 = vrot.slane %v436, 1
    %v438 = vadd.f32 %v436, %v437
    %v439 = vmul.f32 %v438, %v89
    %v440 = vsub.f32 %v431, %v439
    %v441 = vmul.f32 %v440, %v440
    %v442 = vsel %vm196, %v441, 0.0
    %v443 = vrot.slane %v442, 4
    %v444 = vadd.f32 %v442, %v443
    %v445 = vrot.slane %v444, 2
    %v446 = vadd.f32 %v444, %v445
    %v447 = vrot.slane %v446, 1
    %v448 = vadd.f32 %v446, %v447
    %v449 = vmul.f32 %v448, %v89
    %v450 = vadd.f32 %v449, 1e-05
    %v451 = vrsqrt.pop %v450
    %v452 = vmul.f32 %v310, %v451
    %v453 = vlaneseq
    %v454 = vshrl.u32 %v453, 7
    %v455 = vsub.s32 0, %v454
    %v456 = vrot.slane %v452, %v455
    %v457 = vmul.f32 %v440, %v456
    %v458 = vlaneseq
    %v459 = vshrl.u32 %v458, 7
    %v460 = vsub.s32 0, %v459
    %v461 = vrot.slane %v311, %v460
    %v462 = vadd.f32 %v457, %v461
    %v463 = vlaneseq
    %v464 = vshrl.u32 %v463, 7
    %v465 = vsub.s32 0, %v464
    %v466 = vrot.slane %v316, %v465
    %v468 = vsel %vm196, %v462, 0
    %470 = vmatprep.subr.mxu0 0.0
    %471 = vmatpush1.msra.mxu0 %v312
    %472 = vmatprep.subr.mxu0 0.0
    %473 = vmatpush1.msra.mxu0 %v313
    %474 = vmatprep.subr.mxu0 0.0
    %475 = vmatpush1.msra.mxu0 %v314
    %476 = vmatprep.subr.mxu0 0.0
    %477 = vmatpush1.msra.mxu0 %v315
    %478 = vmatprep.subr.mxu0 0.0
    %479 = vmatpush1.msra.mxu0 0.0
    %480 = vmatprep.subr.mxu0 0.0
    %481 = vmatpush1.msra.mxu0 0.0
    %482 = vmatprep.subr.mxu0 0.0
    %483 = vmatpush1.msra.mxu0 0.0
    %484 = vmatprep.subr.mxu0 0.0
    %485 = vmatpush1.msra.mxu0 0.0
    %486 = vmatprep.subr.mxu0 0.0
    %487 = vmatpush1.msra.mxu0 0.0
    %488 = vmatprep.subr.mxu0 0.0
    %489 = vmatpush1.msra.mxu0 0.0
    %490 = vmatprep.subr.mxu0 0.0
    %491 = vmatpush1.msra.mxu0 0.0
    %492 = vmatprep.subr.mxu0 0.0
    %493 = vmatpush1.msra.mxu0 0.0
    %494 = vmatprep.subr.mxu0 0.0
    %495 = vmatpush1.msra.mxu0 0.0
    %496 = vmatprep.subr.mxu0 0.0
    %497 = vmatpush1.msra.mxu0 0.0
    %498 = vmatprep.subr.mxu0 0.0
    %499 = vmatpush1.msra.mxu0 0.0
    %500 = vmatprep.subr.mxu0 0.0
    %501 = vmatpush1.msra.mxu0 0.0
    %502 = vmatprep.subr.mxu0 0.0
    %503 = vmatpush1.msra.mxu0 0.0
    %504 = vmatprep.subr.mxu0 0.0
    %505 = vmatpush1.msra.mxu0 0.0
    %506 = vmatprep.subr.mxu0 0.0
    %507 = vmatpush1.msra.mxu0 0.0
    %508 = vmatprep.subr.mxu0 0.0
    %509 = vmatpush1.msra.mxu0 0.0
    %510 = vmatprep.subr.mxu0 0.0
    %511 = vmatpush1.msra.mxu0 0.0
    %512 = vmatprep.subr.mxu0 0.0
    %513 = vmatpush1.msra.mxu0 0.0
    %514 = vmatprep.subr.mxu0 0.0
    %515 = vmatpush1.msra.mxu0 0.0
    %516 = vmatprep.subr.mxu0 0.0
    %517 = vmatpush1.msra.mxu0 0.0
    %518 = vmatprep.subr.mxu0 0.0
    %519 = vmatpush1.msra.mxu0 0.0
    %520 = vmatprep.subr.mxu0 0.0
    %521 = vmatpush1.msra.mxu0 0.0
    %522 = vmatprep.subr.mxu0 0.0
    %523 = vmatpush1.msra.mxu0 0.0
    %524 = vmatprep.subr.mxu0 0.0
    %525 = vmatpush1.msra.mxu0 0.0
    %526 = vmatprep.subr.mxu0 0.0
    %527 = vmatpush1.msra.mxu0 0.0
    %528 = vmatprep.subr.mxu0 0.0
    %529 = vmatpush1.msra.mxu0 0.0
    %530 = vmatprep.subr.mxu0 0.0
    %531 = vmatpush1.msra.mxu0 0.0
    %532 = vmatprep.subr.mxu0 0.0
    %533 = vmatpush1.msra.mxu0 0.0
    %534 = vmatprep.mubr.f32.mxu0 0.0
    %535 = vmatmul.mubr.f32.gmra.mrb[0].mxu0 %v468
    %v536 = vpop.f32.mrb[0].mxu0
    %v537 = vadd.f32 %v466, %v536
    %v538 = vpop.f32.mrb[0].mxu0
    %539 = vdwg.mxu0
    %v540 = vld [vmem:[#allocation7 + $0x62] sm:$0x1]
    %v541 = vld [vmem:[#allocation7 + $0x63] sm:$0x1]
    %v542 = vld [vmem:[#allocation7 + $0x64] sm:$0xff]
    %v543 = vld [vmem:[#allocation7 + $0x6c] sm:$0x3f]
    %v544 = vld [vmem:[#allocation7 + $0x72] sm:$0x1]
    %v545 = vld [vmem:[#allocation7 + $0x73] sm:$0x1]
    %v546 = vld [vmem:[#allocation7 + $0x74] sm:$0x1]
    %v547 = vld [vmem:[#allocation7 + $0x75] sm:$0xff]
    %v548 = vld [vmem:[#allocation7 + $0x7d] sm:$0xff]
    %v549 = vld [vmem:[#allocation7 + $0x85] sm:$0xff]
    %v550 = vld [vmem:[#allocation7 + $0x8d] sm:$0xff]
    %v551 = vld [vmem:[#allocation7 + $0x95] sm:$0x1]
    %v552 = vld [vmem:[#allocation6] sm:$0xff]
    %vm553 = vcmask 113664
    %v554 = vsel %vm553, %v552, 0.0
    %v555 = vrot.slane %v554, 4
    %v556 = vadd.f32 %v554, %v555
    %v557 = vrot.slane %v556, 2
    %v558 = vadd.f32 %v556, %v557
    %v559 = vrot.slane %v558, 1
    %v560 = vadd.f32 %v558, %v559
    %v561 = vmul.f32 %v560, %v89
    %v562 = vsub.f32 %v552, %v561
    %v563 = vmul.f32 %v562, %v562
    %v564 = vsel %vm553, %v563, 0.0
    %v565 = vrot.slane %v564, 4
    %v566 = vadd.f32 %v564, %v565
    %v567 = vrot.slane %v566, 2
    %v568 = vadd.f32 %v566, %v567
    %v569 = vrot.slane %v568, 1
    %v570 = vadd.f32 %v568, %v569
    %v571 = vmul.f32 %v570, %v89
    %v572 = vadd.f32 %v571, 1e-05
    %v573 = vrsqrt.pop %v572
    %v574 = vmul.f32 %v540, %v573
    %v575 = vlaneseq
    %v576 = vshrl.u32 %v575, 7
    %v577 = vsub.s32 0, %v576
    %v578 = vrot.slane %v574, %v577
    %v579 = vmul.f32 %v562, %v578
    %v580 = vlaneseq
    %v581 = vshrl.u32 %v580, 7
    %v582 = vsub.s32 0, %v581
    %v583 = vrot.slane %v541, %v582
    %v584 = vadd.f32 %v579, %v583
    %v585 = vlaneseq
    %v586 = vshrl.u32 %v585, 7
    %v587 = vsub.s32 0, %v586
    %v588 = vrot.slane %v544, %v587
    %v590 = vsel %vm553, %v584, 0
    %vm592 = vcmask 1045504
    %v594 = vsel %vm592, %v543, 0
    %596 = vmatprep.subr.mxu0 0.0
    %597 = vmatpush1.msra.mxu0 %v542
    %598 = vmatprep.subr.mxu0 0.0
    %599 = vmatpush1.msra.mxu0 %v594
    %600 = vmatprep.subr.mxu0 0.0
    %601 = vmatpush1.msra.mxu0 0.0
    %602 = vmatprep.subr.mxu0 0.0
    %603 = vmatpush1.msra.mxu0 0.0
    %604 = vmatprep.subr.mxu0 0.0
    %605 = vmatpush1.msra.mxu0 0.0
    %606 = vmatprep.subr.mxu0 0.0
    %607 = vmatpush1.msra.mxu0 0.0
    %608 = vmatprep.subr.mxu0 0.0
    %609 = vmatpush1.msra.mxu0 0.0
    %610 = vmatprep.subr.mxu0 0.0
    %611 = vmatpush1.msra.mxu0 0.0
    %612 = vmatprep.subr.mxu0 0.0
    %613 = vmatpush1.msra.mxu0 0.0
    %614 = vmatprep.subr.mxu0 0.0
    %615 = vmatpush1.msra.mxu0 0.0
    %616 = vmatprep.subr.mxu0 0.0
    %617 = vmatpush1.msra.mxu0 0.0
    %618 = vmatprep.subr.mxu0 0.0
    %619 = vmatpush1.msra.mxu0 0.0
    %620 = vmatprep.subr.mxu0 0.0
    %621 = vmatpush1.msra.mxu0 0.0
    %622 = vmatprep.subr.mxu0 0.0
    %623 = vmatpush1.msra.mxu0 0.0
    %624 = vmatprep.subr.mxu0 0.0
    %625 = vmatpush1.msra.mxu0 0.0
    %626 = vmatprep.subr.mxu0 0.0
    %627 = vmatpush1.msra.mxu0 0.0
    %628 = vmatprep.subr.mxu0 0.0
    %629 = vmatpush1.msra.mxu0 0.0
    %630 = vmatprep.subr.mxu0 0.0
    %631 = vmatpush1.msra.mxu0 0.0
    %632 = vmatprep.subr.mxu0 0.0
    %633 = vmatpush1.msra.mxu0 0.0
    %634 = vmatprep.subr.mxu0 0.0
    %635 = vmatpush1.msra.mxu0 0.0
    %636 = vmatprep.subr.mxu0 0.0
    %637 = vmatpush1.msra.mxu0 0.0
    %638 = vmatprep.subr.mxu0 0.0
    %639 = vmatpush1.msra.mxu0 0.0
    %640 = vmatprep.subr.mxu0 0.0
    %641 = vmatpush1.msra.mxu0 0.0
    %642 = vmatprep.subr.mxu0 0.0
    %643 = vmatpush1.msra.mxu0 0.0
    %644 = vmatprep.subr.mxu0 0.0
    %645 = vmatpush1.msra.mxu0 0.0
    %646 = vmatprep.subr.mxu0 0.0
    %647 = vmatpush1.msra.mxu0 0.0
    %648 = vmatprep.subr.mxu0 0.0
    %649 = vmatpush1.msra.mxu0 0.0
    %650 = vmatprep.subr.mxu0 0.0
    %651 = vmatpush1.msra.mxu0 0.0
    %652 = vmatprep.subr.mxu0 0.0
    %653 = vmatpush1.msra.mxu0 0.0
    %654 = vmatprep.subr.mxu0 0.0
    %655 = vmatpush1.msra.mxu0 0.0
    %656 = vmatprep.subr.mxu0 0.0
    %657 = vmatpush1.msra.mxu0 0.0
    %658 = vmatprep.subr.mxu0 0.0
    %659 = vmatpush1.msra.mxu0 0.0
    %660 = vmatprep.mubr.f32.mxu0 0.0
    %661 = vmatmul.mubr.f32.gmra.mrb[0].mxu0 %v590
    %v662 = vpop.f32.mrb[0].mxu0
    %v663 = vadd.f32 %v588, %v662
    %v664 = vpop.f32.mrb[0].mxu0
    %665 = vdwg.mxu0
    %v666 = vmax.f32 %v663, 0.0
    %v667 = vsel %vm196, %v666, 0.0
    %v668 = vrot.slane %v667, 4
    %v669 = vadd.f32 %v667, %v668
    %v670 = vrot.slane %v669, 2
    %v671 = vadd.f32 %v669, %v670
    %v672 = vrot.slane %v671, 1
    %v673 = vadd.f32 %v671, %v672
    %v674 = vmul.f32 %v673, %v89
    %v675 = vsub.f32 %v666, %v674
    %v676 = vmul.f32 %v675, %v675
    %v677 = vsel %vm196, %v676, 0.0
    %v678 = vrot.slane %v677, 4
    %v679 = vadd.f32 %v677, %v678
    %v680 = vrot.slane %v679, 2
    %v681 = vadd.f32 %v679, %v680
    %v682 = vrot.slane %v681, 1
    %v683 = vadd.f32 %v681, %v682
    %v684 = vmul.f32 %v683, %v89
    %v685 = vadd.f32 %v684, 1e-05
    %v686 = vrsqrt.pop %v685
    %v687 = vmul.f32 %v545, %v686
    %v688 = vlaneseq
    %v689 = vshrl.u32 %v688, 7
    %v690 = vsub.s32 0, %v689
    %v691 = vrot.slane %v687, %v690
    %v692 = vmul.f32 %v675, %v691
    %v693 = vlaneseq
    %v694 = vshrl.u32 %v693, 7
    %v695 = vsub.s32 0, %v694
    %v696 = vrot.slane %v546, %v695
    %v697 = vadd.f32 %v692, %v696
    %v698 = vlaneseq
    %v699 = vshrl.u32 %v698, 7
    %v700 = vsub.s32 0, %v699
    %v701 = vrot.slane %v551, %v700
    %v703 = vsel %vm196, %v697, 0
    %705 = vmatprep.subr.mxu0 0.0
    %706 = vmatpush1.msra.mxu0 %v547
    %707 = vmatprep.subr.mxu0 0.0
    %708 = vmatpush1.msra.mxu0 %v548
    %709 = vmatprep.subr.mxu0 0.0
    %710 = vmatpush1.msra.mxu0 %v549
    %711 = vmatprep.subr.mxu0 0.0
    %712 = vmatpush1.msra.mxu0 %v550
    %713 = vmatprep.subr.mxu0 0.0
    %714 = vmatpush1.msra.mxu0 0.0
    %715 = vmatprep.subr.mxu0 0.0
    %716 = vmatpush1.msra.mxu0 0.0
    %717 = vmatprep.subr.mxu0 0.0
    %718 = vmatpush1.msra.mxu0 0.0
    %719 = vmatprep.subr.mxu0 0.0
    %720 = vmatpush1.msra.mxu0 0.0
    %721 = vmatprep.subr.mxu0 0.0
    %722 = vmatpush1.msra.mxu0 0.0
    %723 = vmatprep.subr.mxu0 0.0
    %724 = vmatpush1.msra.mxu0 0.0
    %725 = vmatprep.subr.mxu0 0.0
    %726 = vmatpush1.msra.mxu0 0.0
    %727 = vmatprep.subr.mxu0 0.0
    %728 = vmatpush1.msra.mxu0 0.0
    %729 = vmatprep.subr.mxu0 0.0
    %730 = vmatpush1.msra.mxu0 0.0
    %731 = vmatprep.subr.mxu0 0.0
    %732 = vmatpush1.msra.mxu0 0.0
    %733 = vmatprep.subr.mxu0 0.0
    %734 = vmatpush1.msra.mxu0 0.0
    %735 = vmatprep.subr.mxu0 0.0
    %736 = vmatpush1.msra.mxu0 0.0
    %737 = vmatprep.subr.mxu0 0.0
    %738 = vmatpush1.msra.mxu0 0.0
    %739 = vmatprep.subr.mxu0 0.0
    %740 = vmatpush1.msra.mxu0 0.0
    %741 = vmatprep.subr.mxu0 0.0
    %742 = vmatpush1.msra.mxu0 0.0
    %743 = vmatprep.subr.mxu0 0.0
    %744 = vmatpush1.msra.mxu0 0.0
    %745 = vmatprep.subr.mxu0 0.0
    %746 = vmatpush1.msra.mxu0 0.0
    %747 = vmatprep.subr.mxu0 0.0
    %748 = vmatpush1.msra.mxu0 0.0
    %749 = vmatprep.subr.mxu0 0.0
    %750 = vmatpush1.msra.mxu0 0.0
    %751 = vmatprep.subr.mxu0 0.0
    %752 = vmatpush1.msra.mxu0 0.0
    %753 = vmatprep.subr.mxu0 0.0
    %754 = vmatpush1.msra.mxu0 0.0
    %755 = vmatprep.subr.mxu0 0.0
    %756 = vmatpush1.msra.mxu0 0.0
    %757 = vmatprep.subr.mxu0 0.0
    %758 = vmatpush1.msra.mxu0 0.0
    %759 = vmatprep.subr.mxu0 0.0
    %760 = vmatpush1.msra.mxu0 0.0
    %761 = vmatprep.subr.mxu0 0.0
    %762 = vmatpush1.msra.mxu0 0.0
    %763 = vmatprep.subr.mxu0 0.0
    %764 = vmatpush1.msra.mxu0 0.0
    %765 = vmatprep.subr.mxu0 0.0
    %766 = vmatpush1.msra.mxu0 0.0
    %767 = vmatprep.subr.mxu0 0.0
    %768 = vmatpush1.msra.mxu0 0.0
    %769 = vmatprep.mubr.f32.mxu0 0.0
    %770 = vmatmul.mubr.f32.gmra.mrb[0].mxu0 %v703
    %v771 = vpop.f32.mrb[0].mxu0
    %v772 = vadd.f32 %v701, %v771
    %v773 = vpop.f32.mrb[0].mxu0
    %774 = vdwg.mxu0
    %vm775 = vcmask 130048
    %v776 = vsel %vm775, %v302, -inf
    %777 = vmax.xlane.f32.xlu0 %v776
    %v778 = vpop.xlane.xlu0 %777
    %v779 = vsel %vm775, %v537, -inf
    %780 = vmax.xlane.f32.xlu0 %v779
    %v781 = vpop.xlane.xlu0 %780
    %v782 = vsel %vm775, %v772, -inf
    %783 = vmax.xlane.f32.xlu0 %v782
    %v784 = vpop.xlane.xlu0 %783
    %v785 = vsub.f32 %v302, %v778
    %v786 = vsub.f32 %v537, %v781
    %v787 = vsub.f32 %v772, %v784
    %v788 = vmul.f32 %v785, 1.442695
    %v789 = vpow.pop %v788
    %v790 = vmul.f32 %v786, 1.442695
    %v791 = vpow.pop %v790
    %v792 = vmul.f32 %v787, 1.442695
    %v793 = vpow.pop %v792
    %v794 = vsel %vm775, %v789, 0.0
    %795 = vadd.xlane.f32.xlu0 %v794
    %v796 = vpop.xlane.xlu0 %795
    %v797 = vsel %vm775, %v791, 0.0
    %798 = vadd.xlane.f32.xlu0 %v797
    %v799 = vpop.xlane.xlu0 %798
    %v800 = vsel %vm775, %v793, 0.0
    %801 = vadd.xlane.f32.xlu0 %v800
    %v802 = vpop.xlane.xlu0 %801
    %v803 = vlog2.pop %v796
    %v804 = vmul.f32 %v803, 0.6931472
    %v805 = vlog2.pop %v799
    %v806 = vmul.f32 %v805, 0.6931472
    %v807 = vlog2.pop %v802
    %v808 = vmul.f32 %v807, 0.6931472
    %v809 = vsub.f32 %v785, %v804
    %v810 = vsub.f32 %v786, %v806
    %v811 = vsub.f32 %v787, %v808
    %v813 = vsel %vm775, %v302, 0
    %v816 = vsel %vm775, %v537, 0
    %v819 = vsel %vm775, %v772, 0
    %821 = vmatprep.subr.mxu0 0.0
    %822 = vmatpush1.msra.mxu0 %v66
    %823 = vmatprep.subr.mxu0 0.0
    %824 = vmatpush1.msra.mxu0 %v67
    %825 = vmatprep.subr.mxu0 0.0
    %826 = vmatpush1.msra.mxu0 0.0
    %827 = vmatprep.subr.mxu0 0.0
    %828 = vmatpush1.msra.mxu0 0.0
    %829 = vmatprep.subr.mxu0 0.0
    %830 = vmatpush1.msra.mxu0 0.0
    %831 = vmatprep.subr.mxu0 0.0
    %832 = vmatpush1.msra.mxu0 0.0
    %833 = vmatprep.subr.mxu0 0.0
    %834 = vmatpush1.msra.mxu0 0.0
    %835 = vmatprep.subr.mxu0 0.0
    %836 = vmatpush1.msra.mxu0 0.0
    %837 = vmatprep.subr.mxu0 0.0
    %838 = vmatpush1.msra.mxu0 0.0
    %839 = vmatprep.subr.mxu0 0.0
    %840 = vmatpush1.msra.mxu0 0.0
    %841 = vmatprep.subr.mxu0 0.0
    %842 = vmatpush1.msra.mxu0 0.0
    %843 = vmatprep.subr.mxu0 0.0
    %844 = vmatpush1.msra.mxu0 0.0
    %845 = vmatprep.subr.mxu0 0.0
    %846 = vmatpush1.msra.mxu0 0.0
    %847 = vmatprep.subr.mxu0 0.0
    %848 = vmatpush1.msra.mxu0 0.0
    %849 = vmatprep.subr.mxu0 0.0
    %850 = vmatpush1.msra.mxu0 0.0
    %851 = vmatprep.subr.mxu0 0.0
    %852 = vmatpush1.msra.mxu0 0.0
    %853 = vmatprep.subr.mxu0 0.0
    %854 = vmatpush1.msra.mxu0 0.0
    %855 = vmatprep.subr.mxu0 0.0
    %856 = vmatpush1.msra.mxu0 0.0
    %857 = vmatprep.subr.mxu0 0.0
    %858 = vmatpush1.msra.mxu0 0.0
    %859 = vmatprep.subr.mxu0 0.0
    %860 = vmatpush1.msra.mxu0 0.0
    %861 = vmatprep.subr.mxu0 0.0
    %862 = vmatpush1.msra.mxu0 0.0
    %863 = vmatprep.subr.mxu0 0.0
    %864 = vmatpush1.msra.mxu0 0.0
    %865 = vmatprep.subr.mxu0 0.0
    %866 = vmatpush1.msra.mxu0 0.0
    %867 = vmatprep.subr.mxu0 0.0
    %868 = vmatpush1.msra.mxu0 0.0
    %869 = vmatprep.subr.mxu0 0.0
    %870 = vmatpush1.msra.mxu0 0.0
    %871 = vmatprep.subr.mxu0 0.0
    %872 = vmatpush1.msra.mxu0 0.0
    %873 = vmatprep.subr.mxu0 0.0
    %874 = vmatpush1.msra.mxu0 0.0
    %875 = vmatprep.subr.mxu0 0.0
    %876 = vmatpush1.msra.mxu0 0.0
    %877 = vmatprep.subr.mxu0 0.0
    %878 = vmatpush1.msra.mxu0 0.0
    %879 = vmatprep.subr.mxu0 0.0
    %880 = vmatpush1.msra.mxu0 0.0
    %881 = vmatprep.subr.mxu0 0.0
    %882 = vmatpush1.msra.mxu0 0.0
    %883 = vmatprep.subr.mxu0 0.0
    %884 = vmatpush1.msra.mxu0 0.0
    %885 = vmatprep.mubr.f32.mxu0 0.0
    %886 = vmatmul.mubr.f32.gmra.mrb[0].mxu0 %v813
    %v887 = vpop.f32.mrb[0].mxu0
    %v888 = vadd.f32 0.0, %v887
    %v889 = vpop.f32.mrb[0].mxu0
    %890 = vmatprep.mubr.f32.mxu0 0.0
    %891 = vmatmul.mubr.f32.gmra.mrb[0].mxu0 %v816
    %v892 = vpop.f32.mrb[0].mxu0
    %v893 = vadd.f32 0.0, %v892
    %v894 = vpop.f32.mrb[0].mxu0
    %895 = vmatprep.mubr.f32.mxu0 0.0
    %896 = vmatmul.mubr.f32.gmra.mrb[0].mxu0 %v819
    %v897 = vpop.f32.mrb[0].mxu0
    %v898 = vadd.f32 0.0, %v897
    %v899 = vpop.f32.mrb[0].mxu0
    %900 = vdwg.mxu0
    %v901 = vmul.f32 %v888, 0.62996054
    %v902 = vmul.f32 %v893, 0.62996054
    %v903 = vmul.f32 %v898, 0.62996054
    %v904 = vmul.f32 %v901, %v902
    %v905 = vmul.f32 %v904, %v903
    %v907 = vsel %vm775, %v905, 0
    %909 = vmatprep.subr.mxu0 0.0
    %910 = vmatpush1.msra.mxu0 %v66
    %911 = vmatprep.subr.mxu0 0.0
    %912 = vmatpush1.msra.mxu0 %v67
    %913 = vmatprep.subr.mxu0 0.0
    %914 = vmatpush1.msra.mxu0 0.0
    %915 = vmatprep.subr.mxu0 0.0
    %916 = vmatpush1.msra.mxu0 0.0
    %917 = vmatprep.subr.mxu0 0.0
    %918 = vmatpush1.msra.mxu0 0.0
    %919 = vmatprep.subr.mxu0 0.0
    %920 = vmatpush1.msra.mxu0 0.0
    %921 = vmatprep.subr.mxu0 0.0
    %922 = vmatpush1.msra.mxu0 0.0
    %923 = vmatprep.subr.mxu0 0.0
    %924 = vmatpush1.msra.mxu0 0.0
    %925 = vmatprep.subr.mxu0 0.0
    %926 = vmatpush1.msra.mxu0 0.0
    %927 = vmatprep.subr.mxu0 0.0
    %928 = vmatpush1.msra.mxu0 0.0
    %929 = vmatprep.subr.mxu0 0.0
    %930 = vmatpush1.msra.mxu0 0.0
    %931 = vmatprep.subr.mxu0 0.0
    %932 = vmatpush1.msra.mxu0 0.0
    %933 = vmatprep.subr.mxu0 0.0
    %934 = vmatpush1.msra.mxu0 0.0
    %935 = vmatprep.subr.mxu0 0.0
    %936 = vmatpush1.msra.mxu0 0.0
    %937 = vmatprep.subr.mxu0 0.0
    %938 = vmatpush1.msra.mxu0 0.0
    %939 = vmatprep.subr.mxu0 0.0
    %940 = vmatpush1.msra.mxu0 0.0
    %941 = vmatprep.subr.mxu0 0.0
    %942 = vmatpush1.msra.mxu0 0.0
    %943 = vmatprep.subr.mxu0 0.0
    %944 = vmatpush1.msra.mxu0 0.0
    %945 = vmatprep.subr.mxu0 0.0
    %946 = vmatpush1.msra.mxu0 0.0
    %947 = vmatprep.subr.mxu0 0.0
    %948 = vmatpush1.msra.mxu0 0.0
    %949 = vmatprep.subr.mxu0 0.0
    %950 = vmatpush1.msra.mxu0 0.0
    %951 = vmatprep.subr.mxu0 0.0
    %952 = vmatpush1.msra.mxu0 0.0
    %953 = vmatprep.subr.mxu0 0.0
    %954 = vmatpush1.msra.mxu0 0.0
    %955 = vmatprep.subr.mxu0 0.0
    %956 = vmatpush1.msra.mxu0 0.0
    %957 = vmatprep.subr.mxu0 0.0
    %958 = vmatpush1.msra.mxu0 0.0
    %959 = vmatprep.subr.mxu0 0.0
    %960 = vmatpush1.msra.mxu0 0.0
    %961 = vmatprep.subr.mxu0 0.0
    %962 = vmatpush1.msra.mxu0 0.0
    %963 = vmatprep.subr.mxu0 0.0
    %964 = vmatpush1.msra.mxu0 0.0
    %965 = vmatprep.subr.mxu0 0.0
    %966 = vmatpush1.msra.mxu0 0.0
    %967 = vmatprep.subr.mxu0 0.0
    %968 = vmatpush1.msra.mxu0 0.0
    %969 = vmatprep.subr.mxu0 0.0
    %970 = vmatpush1.msra.mxu0 0.0
    %971 = vmatprep.subr.mxu0 0.0
    %972 = vmatpush1.msra.mxu0 0.0
    %973 = vmatprep.mubr.f32.mxu0 0.0
    %974 = vmatmul.mubr.f32.gmra.mrb[0].mxu0 %v907
    %v975 = vpop.f32.mrb[0].mxu0
    %v976 = vadd.f32 0.0, %v975
    %v977 = vpop.f32.mrb[0].mxu0
    %978 = vdwg.mxu0
    %v979 = vmul.f32 %v976, 0.25
    %v980 = vsel %vm775, %v979, -inf
    %981 = vmax.xlane.f32.xlu0 %v980
    %v982 = vpop.xlane.xlu0 %981
    %v983 = vsub.f32 %v979, %v982
    %v984 = vmul.f32 %v983, 1.442695
    %v985 = vpow.pop %v984
    %v986 = vsel %vm775, %v985, 0.0
    %987 = vadd.xlane.f32.xlu0 %v986
    %v988 = vpop.xlane.xlu0 %987
    %v989 = vlog2.pop %v988
    %v990 = vmul.f32 %v989, 0.6931472
    %v991 = vsub.f32 %v983, %v990
    %993 = vrot.lane.b32.xlu0 %v810, 16
    %v994 = vpop.permute.xlu0 %993
    %997 = vrot.lane.b32.xlu0 %v811, 32
    %v998 = vpop.permute.xlu0 %997
    %1001 = vrot.lane.b32.xlu0 %v991, 48
    %v1002 = vpop.permute.xlu0 %1001
    %v1004 = vsel %vm775, %v809, %v994
    %v1005 = vsel %vm196, %v1004, %v998
    %vm1006 = vcmask 392192
    %v1007 = vsel %vm1006, %v1005, %v1002
    %vm1008 = vcmask 523264
    %v1009 = vsel %vm1008, %v1007, 0.0
    %1010 = vst [vmem:[%s4] sm:$0xff] %v1009
    // Predicated region
    $region34: #{groupnet_forward.1} parent=1 // pred_check
      _
    $region35: #{groupnet_forward.1} parent=1 // pred_check_branch
      %1012 = sbr.rel (0) target = $region37
    $region36: #{groupnet_forward.1} parent=1 // pred_region
      _
    $region37: #{groupnet_forward.1} parent=1 // pred_fallthru
      _
    // Predicated region
    $region38: #{groupnet_forward.1} parent=1 // pred_check
      _
    $region39: #{groupnet_forward.1} parent=1 // pred_check_branch
      %1014 = sbr.rel (0) target = $region41
    $region40: #{groupnet_forward.1} parent=1 // pred_region
      _
    $region41: #{groupnet_forward.1} parent=1 // pred_fallthru
      _
    %1015 = vsyncpa [#allocation3], 1
    %1016 = vsyncpa [#allocation5], 1
    %1017 = vsyncpa [#allocation8], 1

</llo_original>
